<compile_context>
chip_gen: v5e
topology: v5e:2x2
jax: 0.10.0
libtpu: 0.0.40
codegen_flags: <defaults>
</compile_context>

<pallas_src>
import functools

import jax
import jax.numpy as jnp
from jax.experimental import pallas as pl
from jax.experimental.pallas import tpu as pltpu


def _ce_kernel(pred_ref, tar_ref, loss_ref, *, n_valid, tile_n):
    i = pl.program_id(0)

    logits = pred_ref[...].astype(jnp.float32)            # (TILE_N, C)  f32 math
    tar = tar_ref[...]                                     # (TILE_N, 1)  int32

    # Stable log-sum-exp over the class (lane) axis.
    m = jnp.max(logits, axis=-1, keepdims=True)            # (TILE_N, 1)
    sum_exp = jnp.sum(jnp.exp(logits - m), axis=-1, keepdims=True)

    # Gather the target logit with a vectorized compare + masked reduce
    # (no dynamic lane gather on TPU; avoids a full one-hot f32 temporary).
    col = jax.lax.broadcasted_iota(jnp.int32, logits.shape, 1)
    tgt = jnp.sum(jnp.where(col == tar, logits, 0.0), axis=-1, keepdims=True)

    per_row = (m - tgt) + jnp.log(sum_exp)                  # (TILE_N, 1)

    # Zero out padded rows so the wrapper-side sum is exact.
    row = i * tile_n + jax.lax.broadcasted_iota(jnp.int32, per_row.shape, 0)
    loss_ref[...] = jnp.where(row < n_valid, per_row, 0.0)


def _pick_tile_n(n_rows, n_classes):
    """Multiple-of-8 row tile sized to stay well inside scoped VMEM."""
    n_pad8 = max(8, ((n_rows + 7) // 8) * 8)
    budget = 12 * 1024 * 1024  # safe under 16 MiB (v5e) / 32 MiB (v6e, v7x) scoped default
    # ~4 live f32 copies of the (TILE_N, C) block: 2x double-buffered input
    # plus ~2 temporaries (exp result, masked compare).
    bytes_per_row = 4 * 4 * max(n_classes, 1)
    t = (budget // bytes_per_row) // 8 * 8
    t = max(8, min(1024, t))
    return min(t, n_pad8)


def cross_entropy_loss(pred, tar, tile_n=None):
    """pred: (N, C) float logits, tar: (N,) int class indices -> scalar mean CE."""
    N, C = pred.shape
    if tile_n is None:
        tile_n = _pick_tile_n(N, C)

    n_tiles = pl.cdiv(N, tile_n)
    n_pad = n_tiles * tile_n

    tar2 = tar.astype(jnp.int32).reshape(N, 1)
    if n_pad != N:
        pred = jnp.pad(pred, ((0, n_pad - N), (0, 0)))
        tar2 = jnp.pad(tar2, ((0, n_pad - N), (0, 0)), constant_values=-1)

    cost = pl.CostEstimate(
        flops=5 * N * C,                 # max, sub, cmp/select, masked sum, sum
        transcendentals=N * C + N,       # exp per element + log per row
        bytes_accessed=n_pad * C * pred.dtype.itemsize + n_pad * 4 + n_pad * 4,
    )

    per_row = pl.pallas_call(
        functools.partial(_ce_kernel, n_valid=N, tile_n=tile_n),
        out_shape=jax.ShapeDtypeStruct((n_pad, 1), jnp.float32),
        grid=(n_tiles,),
        in_specs=[
            pl.BlockSpec((tile_n, C), lambda i: (i, 0)),
            pl.BlockSpec((tile_n, 1), lambda i: (i, 0)),
        ],
        out_specs=pl.BlockSpec((tile_n, 1), lambda i: (i, 0)),
        compiler_params=pltpu.CompilerParams(
            dimension_semantics=("parallel",),
        ),
        cost_estimate=cost,
    )(pred, tar2)

    # Tiny final reduction in the wrapper (padded rows were already zeroed).
    return jnp.sum(per_row) / jnp.float32(N)


if __name__ == "__main__":
    key = jax.random.PRNGKey(0)
    k_pred, k_tar = jax.random.split(key)

    # Small shapes consistent with the module: batch=8 rows, 32 classes.
    N, C = 8, 32
    pred1 = jax.random.normal(k_pred, (N, C), dtype=jnp.float32)
    tar1 = jax.random.randint(k_tar, (N,), 0, C, dtype=jnp.int32)

    loss = cross_entropy_loss(pred1, tar1)
    jax.block_until_ready(loss)

    # Reference: same math as nn.CrossEntropyLoss(reduction='mean').
    logp = jax.nn.log_softmax(pred1, axis=-1)
    ref = -jnp.mean(jnp.take_along_axis(logp, tar1[:, None], axis=-1))
    assert jnp.allclose(loss, ref, atol=1e-5), (loss, ref)

    # Secondary check: N not a multiple of the tile -> exercises row padding/masking.
    k2p, k2t = jax.random.split(jax.random.PRNGKey(1))
    N2 = 13
    pred2 = jax.random.normal(k2p, (N2, C), dtype=jnp.float32)
    tar2 = jax.random.randint(k2t, (N2,), 0, C, dtype=jnp.int32)
    loss2 = cross_entropy_loss(pred2, tar2)
    jax.block_until_ready(loss2)
    logp2 = jax.nn.log_softmax(pred2, axis=-1)
    ref2 = -jnp.mean(jnp.take_along_axis(logp2, tar2[:, None], axis=-1))
    assert jnp.allclose(loss2, ref2, atol=1e-5), (loss2, ref2)

    print("KERNEL_OK")
</pallas_src>

<mosaic_0001>
module attributes {stable_mosaic.version = 11 : i64} {
  func.func @_ce_kernel(%arg0: i32, %arg1: memref<8x32xf32, #tpu.memory_space<vmem>>, %arg2: memref<8x1xi32, #tpu.memory_space<vmem>>, %arg3: memref<8x1xf32, #tpu.memory_space<vmem>>) attributes {dimension_semantics = [#tpu.dimension_semantics<parallel>], iteration_bounds = array<i64: 1>, scalar_prefetch = 0 : i64, scratch_operands = 0 : i64, tpu.core_type = #tpu.core_type<tc>, window_params = [{transform_indices = @transform_0, window_bounds = array<i64: 8, 32>}, {transform_indices = @transform_1, window_bounds = array<i64: 8, 1>}, {transform_indices = @transform_2, window_bounds = array<i64: 8, 1>}]} {
    %c0 = arith.constant 0 : index
    %c0_0 = arith.constant 0 : index
    %0 = vector.load %arg1[%c0, %c0_0] : memref<8x32xf32, #tpu.memory_space<vmem>>, vector<8x32xf32>
    %c0_1 = arith.constant 0 : index
    %c0_2 = arith.constant 0 : index
    %1 = vector.load %arg2[%c0_1, %c0_2] : memref<8x1xi32, #tpu.memory_space<vmem>>, vector<8x1xi32>
    %cst = arith.constant dense<0xFF800000> : vector<8xf32>
    %2 = vector.multi_reduction <maximumf>, %0, %cst [1] : vector<8x32xf32> to vector<8xf32>
    %3 = vector.shape_cast %2 : vector<8xf32> to vector<8x1xf32>
    %4 = vector.broadcast %3 : vector<8x1xf32> to vector<8x32xf32>
    %5 = arith.subf %0, %4 : vector<8x32xf32>
    %6 = math.exp %5 : vector<8x32xf32>
    %cst_3 = arith.constant dense<0.000000e+00> : vector<8xf32>
    %7 = vector.multi_reduction <add>, %6, %cst_3 [1] : vector<8x32xf32> to vector<8xf32>
    %8 = vector.shape_cast %7 : vector<8xf32> to vector<8x1xf32>
    %9 = tpu.iota {dimensions = array<i32: 1>} : vector<8x32xi32>
    %10 = vector.broadcast %1 : vector<8x1xi32> to vector<8x32xi32>
    %11 = arith.cmpi eq, %9, %10 : vector<8x32xi32>
    %cst_4 = arith.constant 0.000000e+00 : f32
    %12 = vector.broadcast %cst_4 : f32 to vector<8x32xf32>
    %13 = arith.select %11, %0, %12 : vector<8x32xi1>, vector<8x32xf32>
    %cst_5 = arith.constant dense<0.000000e+00> : vector<8xf32>
    %14 = vector.multi_reduction <add>, %13, %cst_5 [1] : vector<8x32xf32> to vector<8xf32>
    %15 = vector.shape_cast %14 : vector<8xf32> to vector<8x1xf32>
    %16 = arith.subf %3, %15 : vector<8x1xf32>
    %17 = math.log %8 : vector<8x1xf32>
    %18 = arith.addf %16, %17 : vector<8x1xf32>
    %c8_i32 = arith.constant 8 : i32
    %19 = arith.muli %arg0, %c8_i32 : i32
    %20 = tpu.iota {dimensions = array<i32: 0>} : vector<8x1xi32>
    %21 = vector.broadcast %19 : i32 to vector<8x1xi32>
    %22 = arith.addi %21, %20 : vector<8x1xi32>
    %c8_i32_6 = arith.constant 8 : i32
    %23 = vector.broadcast %c8_i32_6 : i32 to vector<8x1xi32>
    %24 = arith.cmpi slt, %22, %23 : vector<8x1xi32>
    %cst_7 = arith.constant 0.000000e+00 : f32
    %25 = vector.broadcast %cst_7 : f32 to vector<8x1xf32>
    %26 = arith.select %24, %18, %25 : vector<8x1xi1>, vector<8x1xf32>
    %c0_8 = arith.constant 0 : index
    %c0_9 = arith.constant 0 : index
    %27 = vector.load %arg3[%c0_8, %c0_9] : memref<8x1xf32, #tpu.memory_space<vmem>>, vector<8x1xf32>
    tpu.vector_store %arg3[%c0_8, %c0_9], %26 {strides = array<i32>} : memref<8x1xf32, #tpu.memory_space<vmem>>, vector<8x1xf32>,
    return
  }
  func.func @transform_0(%arg0: i32) -> (i32, i32) {
    %c0_i32 = arith.constant 0 : i32
    %c0_i32_0 = arith.constant 0 : i32
    return %arg0, %c0_i32 : i32, i32
  }
  func.func @transform_1(%arg0: i32) -> (i32, i32) {
    %c0_i32 = arith.constant 0 : i32
    %c0_i32_0 = arith.constant 0 : i32
    return %arg0, %c0_i32 : i32, i32
  }
  func.func @transform_2(%arg0: i32) -> (i32, i32) {
    %c0_i32 = arith.constant 0 : i32
    %c0_i32_0 = arith.constant 0 : i32
    return %arg0, %c0_i32 : i32, i32
  }
}

</mosaic_0001>

<llo_original>
// kernel: tpu_custom_call.1
$region0: #{tpu_custom_call.1}
  #allocation0 [shape = 'u32[]', space=smem, size = 0x4, offset = 0x4, fixed_abs, tag = 'smem constant byte address 0x4 - core index']
  #allocation1 [shape = 'u32[72,128]{1,0:T(1,128)}', space=vmem, size = 0x9000, scoped, tag = 'internal scratch']
  %s0 = inlined_call_operand.vmem [shape: f32[8,32], index: 0, kind: input, shape index: {}]
  %s1 = inlined_call_operand.vmem [shape: s32[8,1], index: 1, kind: input, shape index: {}]
  %s2 = inlined_call_operand.vmem [shape: f32[8,1], index: 2, kind: output, shape index: {}]
  %s3 = sld [smem:[#allocation0]]
  $region18: #{tpu_custom_call.1} parent=0
    _
  %s5 = ssub.s32 1, %s3
  %s6 = scalar_select 0, %s5, %s3
  // Predicated region
  $region2: #{tpu_custom_call.1} parent=0 // pred_check
    _
  $region3: #{tpu_custom_call.1} parent=0 // pred_check_branch
    %8 = sbr.rel (0) target = $region5
  $region4: #{tpu_custom_call.1} parent=0 // pred_region
    _
  $region5: #{tpu_custom_call.1} parent=0 // pred_fallthru
    _
  // Predicated region
  $region6: #{tpu_custom_call.1} parent=0 // pred_check
    _
  $region7: #{tpu_custom_call.1} parent=0 // pred_check_branch
    %10 = sbr.rel (0) target = $region9
  $region8: #{tpu_custom_call.1} parent=0 // pred_region
    _
  $region9: #{tpu_custom_call.1} parent=0 // pred_fallthru
    _
  %v11 = vld [vmem:[%s0] sm:$0xff]
  %v12 = vld [vmem:[%s1] sm:$0xff]
  %vm13 = vcmask 261120
  %v14 = vsel %vm13, %v11, -inf
  %15 = vmax.xlane.f32.xlu0 %v14
  %v16 = vpop.xlane.xlu0 %15
  %v17 = vsub.f32 %v11, %v16
  %v18 = vmul.f32 %v17, 1.442695
  %v19 = vpow.pop %v18
  %v20 = vsel %vm13, %v19, 0.0
  %21 = vadd.xlane.f32.xlu0 %v20
  %v22 = vpop.xlane.xlu0 %21
  %v23 = vlaneseq
  %v24 = vand.u32 %v23, 127
  %25 = vset.pattern.permute.xlu0 0
  %26 = vperm.xlu0 %25, %v12
  %v27 = vpop.permute.xlu0 %26
  %vm28 = vcmp.eq.s32.totalorder %v24, %v27
  %v29 = vsel %vm28, %v11, 0.0
  %v30 = vsel %vm13, %v29, 0.0
  %31 = vadd.xlane.f32.xlu0 %v30
  %v32 = vpop.xlane.xlu0 %31
  %v33 = vsub.f32 %v16, %v32
  %v34 = vlog2.pop %v22
  %v35 = vmul.f32 %v34, 0.6931472
  %v36 = vadd.f32 %v33, %v35
  %s37 = smul.u32 0, 8
  %v38 = vlaneseq
  %v39 = vshrl.u32 %v38, 7
  %v40 = vstv %s37
  %v41 = vadd.s32 %v40, %v39
  %vm42 = vcmp.lt.s32.totalorder %v41, 8
  %v43 = vsel %vm42, %v36, 0.0
  %vm44 = vcmask 7168
  %45 = vst.msk [vmem:[%s2] sm:$0xff] %vm44, %v43
  // Predicated region
  $region10: #{tpu_custom_call.1} parent=0 // pred_check
    _
  $region11: #{tpu_custom_call.1} parent=0 // pred_check_branch
    %47 = sbr.rel (0) target = $region13
  $region12: #{tpu_custom_call.1} parent=0 // pred_region
    _
  $region13: #{tpu_custom_call.1} parent=0 // pred_fallthru
    _
  // Predicated region
  $region14: #{tpu_custom_call.1} parent=0 // pred_check
    _
  $region15: #{tpu_custom_call.1} parent=0 // pred_check_branch
    %49 = sbr.rel (0) target = $region17
  $region16: #{tpu_custom_call.1} parent=0 // pred_region
    _
  $region17: #{tpu_custom_call.1} parent=0 // pred_fallthru
    _

</llo_original>
